<compile_context>
chip_gen: v5e
topology: v5e:2x2
jax: 0.10.0
libtpu: 0.0.40
codegen_flags: <defaults>
</compile_context>

<pallas_src>
import jax
import jax.numpy as jnp
from jax.experimental import pallas as pl
from jax.experimental.pallas import tpu as pltpu


def _snake_kernel(p_ref, x_ref, o_ref):
    # p_ref: (C, 2) f32; column 0 = alpha (already exp'd if logscale),
    #                    column 1 = 1 / (alpha + eps)  (precomputed in wrapper)
    # x_ref / o_ref: (C, T_TILE)  (leading batch dim squeezed away)
    p = p_ref[...]
    a = p[:, 0:1]        # (C, 1) -> lane-broadcast against (C, T_TILE)
    inv = p[:, 1:2]      # (C, 1)
    x = x_ref[...].astype(jnp.float32)
    s = jnp.sin(x * a)
    o_ref[...] = (x + inv * (s * s)).astype(o_ref.dtype)


def snake(x: jax.Array, alpha: jax.Array, *, logscale: bool = True,
          eps: float = 1e-6,
          target_block_bytes: int = 6 * 1024 * 1024) -> jax.Array:
    """Snake activation. x: (B, C, T), alpha: (C,)."""
    B, C, T = x.shape
    out_dtype = x.dtype
    itemsize = jnp.dtype(x.dtype).itemsize

    # One-time O(C) parameter math in the wrapper (fused by XLA).
    a = alpha.astype(jnp.float32)
    if logscale:
        a = jnp.exp(a)
    inv = 1.0 / (a + jnp.float32(eps))
    params = jnp.stack([a, inv], axis=1)          # (C, 2) f32

    # Time tile: ~target_block_bytes per block, a multiple of 128 lanes.
    # If the whole time axis fits in one tile, use the full extent (legal for
    # any T via the "block == full array dim" exception).
    lane = 128
    t_tile = max(lane,
                 (target_block_bytes // max(C * itemsize, 1)) // lane * lane)
    if t_tile >= T:
        t_tile = T

    grid = (B, pl.cdiv(T, t_tile))

    cost = pl.CostEstimate(
        flops=5 * B * C * T,
        transcendentals=B * C * T,
        bytes_accessed=2 * B * C * T * itemsize + C * 2 * 4,
    )

    return pl.pallas_call(
        _snake_kernel,
        out_shape=jax.ShapeDtypeStruct((B, C, T), out_dtype),
        grid_spec=pltpu.PrefetchScalarGridSpec(
            num_scalar_prefetch=0,
            grid=grid,
            in_specs=[
                # Packed per-channel constants: same full (C, 2) block every
                # step (block == full array dims, so no (8,128) constraint).
                pl.BlockSpec((C, 2), lambda b, t: (0, 0)),
                # x: one (batch, time-tile) block per grid step; batch squeezed.
                pl.BlockSpec((pl.Squeezed(), C, t_tile),
                             lambda b, t: (b, 0, t)),
            ],
            out_specs=pl.BlockSpec((pl.Squeezed(), C, t_tile),
                                   lambda b, t: (b, 0, t)),
        ),
        compiler_params=pltpu.CompilerParams(
            dimension_semantics=("parallel", "parallel"),
            vmem_limit_bytes=48 * 1024 * 1024,
        ),
        cost_estimate=cost,
    )(params, x)


def snake_ref(x, alpha, *, logscale=True, eps=1e-6):
    a = alpha[None, :, None].astype(jnp.float32)
    if logscale:
        a = jnp.exp(a)
    xf = x.astype(jnp.float32)
    y = xf + 1.0 / (a + eps) * jnp.sin(xf * a) ** 2
    return y.astype(x.dtype)


if __name__ == "__main__":
    key = jax.random.PRNGKey(0)
    kx, ka, kx2, ka2, kx3 = jax.random.split(key, 5)

    # 1) Small shape consistent with the module's forward: x is (B, C, T).
    B, C, T = 2, 4, 16
    x = jax.random.normal(kx, (B, C, T), dtype=jnp.float32)
    # Matches Snake.__init__(channels=C, alpha=0.0, logscale=True) plus a small
    # deterministic perturbation so the per-channel broadcast is exercised.
    alpha_param = jnp.zeros((C,), jnp.float32) + 0.1 * jax.random.normal(
        ka, (C,), dtype=jnp.float32)
    y = snake(x, alpha_param, logscale=True, eps=1e-6)
    jax.block_until_ready(y)
    y_ref = snake_ref(x, alpha_param, logscale=True, eps=1e-6)
    assert jnp.allclose(y, y_ref, atol=1e-5, rtol=1e-5), "mismatch vs reference"

    # 2) Ragged time axis + non-sublane-multiple channels; tiny block budget
    #    forces a multi-tile grid with a masked final tile (300 = 2*128 + 44).
    B2, C2, T2 = 1, 6, 300
    x2 = jax.random.normal(kx2, (B2, C2, T2), dtype=jnp.float32)
    alpha2 = 0.1 * jax.random.normal(ka2, (C2,), dtype=jnp.float32)
    y2 = snake(x2, alpha2, logscale=True, eps=1e-6, target_block_bytes=4096)
    jax.block_until_ready(y2)
    y2_ref = snake_ref(x2, alpha2, logscale=True, eps=1e-6)
    assert jnp.allclose(y2, y2_ref, atol=1e-5, rtol=1e-5), \
        "mismatch vs reference (ragged/multi-tile)"

    # 3) bf16 I/O path (compute stays f32 inside the kernel).
    x3 = jax.random.normal(kx3, (2, 8, 256), dtype=jnp.bfloat16)
    alpha3 = jnp.zeros((8,), jnp.float32)
    y3 = snake(x3, alpha3, logscale=True, eps=1e-6)
    jax.block_until_ready(y3)
    y3_ref = snake_ref(x3, alpha3, logscale=True, eps=1e-6)
    assert jnp.allclose(y3.astype(jnp.float32), y3_ref.astype(jnp.float32),
                        atol=2e-2, rtol=2e-2), "mismatch vs reference (bf16)"

    print("KERNEL_OK")
</pallas_src>

<mosaic_0001>
module attributes {stable_mosaic.version = 11 : i64} {
  func.func @_snake_kernel(%arg0: i32, %arg1: i32, %arg2: memref<4x2xf32, #tpu.memory_space<vmem>>, %arg3: memref<1x4x16xf32, #tpu.memory_space<vmem>>, %arg4: memref<1x4x16xf32, #tpu.memory_space<vmem>>) attributes {dimension_semantics = [#tpu.dimension_semantics<parallel>, #tpu.dimension_semantics<parallel>], iteration_bounds = array<i64: 2, 1>, scalar_prefetch = 0 : i64, scratch_operands = 0 : i64, tpu.core_type = #tpu.core_type<tc>, window_params = [{pipeline_mode = #tpu.pipeline_mode<synchronous>, transform_indices = @transform_0, window_bounds = array<i64: 4, 2>}, {transform_indices = @transform_1, window_bounds = array<i64: 1, 4, 16>}, {transform_indices = @transform_2, window_bounds = array<i64: 1, 4, 16>}]} {
    %c0 = arith.constant 0 : index
    %c0_0 = arith.constant 0 : index
    %0 = vector.load %arg2[%c0, %c0_0] : memref<4x2xf32, #tpu.memory_space<vmem>>, vector<4x2xf32>
    %1 = vector.extract_strided_slice %0 {offsets = [0, 0], sizes = [4, 1], strides = [1, 1]} : vector<4x2xf32> to vector<4x1xf32>
    %2 = vector.extract_strided_slice %0 {offsets = [0, 1], sizes = [4, 1], strides = [1, 1]} : vector<4x2xf32> to vector<4x1xf32>
    %c0_1 = arith.constant 0 : index
    %c0_2 = arith.constant 0 : index
    %c0_3 = arith.constant 0 : index
    %3 = vector.load %arg3[%c0_1, %c0_2, %c0_3] : memref<1x4x16xf32, #tpu.memory_space<vmem>>, vector<1x4x16xf32>
    %4 = vector.shape_cast %3 : vector<1x4x16xf32> to vector<4x16xf32>
    %5 = vector.broadcast %1 : vector<4x1xf32> to vector<4x16xf32>
    %6 = arith.mulf %4, %5 : vector<4x16xf32>
    %7 = math.sin %6 : vector<4x16xf32>
    %8 = arith.mulf %7, %7 : vector<4x16xf32>
    %9 = vector.broadcast %2 : vector<4x1xf32> to vector<4x16xf32>
    %10 = arith.mulf %9, %8 : vector<4x16xf32>
    %11 = arith.addf %4, %10 : vector<4x16xf32>
    %c0_4 = arith.constant 0 : index
    %c0_5 = arith.constant 0 : index
    %c0_6 = arith.constant 0 : index
    %12 = vector.load %arg4[%c0_4, %c0_5, %c0_6] : memref<1x4x16xf32, #tpu.memory_space<vmem>>, vector<1x4x16xf32>
    %13 = vector.shape_cast %12 : vector<1x4x16xf32> to vector<4x16xf32>
    %14 = vector.shape_cast %11 : vector<4x16xf32> to vector<1x4x16xf32>
    tpu.vector_store %arg4[%c0_4, %c0_5, %c0_6], %14 {strides = array<i32>} : memref<1x4x16xf32, #tpu.memory_space<vmem>>, vector<1x4x16xf32>,
    return
  }
  func.func @transform_0(%arg0: i32, %arg1: i32) -> (i32, i32) {
    %c0_i32 = arith.constant 0 : i32
    %c0_i32_0 = arith.constant 0 : i32
    %c0_i32_1 = arith.constant 0 : i32
    return %c0_i32, %c0_i32_0 : i32, i32
  }
  func.func @transform_1(%arg0: i32, %arg1: i32) -> (i32, i32, i32) {
    %c0_i32 = arith.constant 0 : i32
    %c0_i32_0 = arith.constant 0 : i32
    return %arg0, %c0_i32, %arg1 : i32, i32, i32
  }
  func.func @transform_2(%arg0: i32, %arg1: i32) -> (i32, i32, i32) {
    %c0_i32 = arith.constant 0 : i32
    %c0_i32_0 = arith.constant 0 : i32
    return %arg0, %c0_i32, %arg1 : i32, i32, i32
  }
}

</mosaic_0001>

<llo_original>
// kernel: tpu_custom_call.1
$region0: #{tpu_custom_call.1}
  #allocation0 [shape = 'u32[]', space=smem, size = 0x4, offset = 0x4, fixed_abs, tag = 'smem constant byte address 0x4 - core index']
  #allocation1 [shape = 'u32[72,128]{1,0:T(1,128)}', space=vmem, size = 0x9000, scoped, tag = 'internal scratch']
  %s0 = inlined_call_operand.vmem [shape: f32[4,2], index: 0, kind: input, shape index: {}]
  %s1 = inlined_call_operand.hbm [shape: f32[2,4,16], index: 1, kind: input, shape index: {}]
  %s2 = inlined_call_operand.hbm [shape: f32[2,4,16], index: 2, kind: output, shape index: {}]
  %s3 = sld [smem:[#allocation0]]
  $region45: #{tpu_custom_call.1} parent=0
    _
  %s5 = ssub.s32 1, %s3
  %s6 = scalar_select 0, %s5, %s3
  $region1: #{tpu_custom_call.1} parent=0
    #allocation2 [shape = 'u8[4096]{0}', space=vmem, size = 0x1000, scoped, tag = 'input window, operand 1']
    #allocation3 [shape = 's32[2]{0}', space=sflag, size = 0x8, scoped, tag = 'scoped memory for tpu_custom_call.1']
    #allocation4 [shape = 's32[2]{0}', space=sflag, size = 0x8, scoped, tag = 'scoped memory for tpu_custom_call.1']
    #allocation5 [shape = 'u8[4096]{0}', space=vmem, size = 0x1000, scoped, tag = 'output window, operand 0']
    %7 = vsyncpa [#allocation3], 0
    %s8 = scalar_lea.sflag [#allocation3], 1
    %9 = vsyncpa %s8, 0
    %10 = vsyncpa [#allocation4], 0
    %s11 = scalar_lea.sflag [#allocation4], 1
    %12 = vsyncpa %s11, 0
    loop: start=0, step=1, limit=4
    $region2: #{tpu_custom_call.1} parent=1 // loop_pre_header
      _
    $region3: #{tpu_custom_call.1} parent=1 // loop_header
      %s14 = sphi 0, %s18
      %p15 = scmp.ge.s32.totalorder %s14, 4
      %s21 = sphi 0, %s33
      %s22 = sphi 0, %s29
      %s23 = sphi 0, %s21
      %s24 = sphi 0, %s22
      %s25 = sphi 0, %s23
      %s26 = sphi 0, %s24
      %s34 = sphi 0, %s34
      %s36 = sphi 0, %s34
      %s37 = sphi 0, %s36
      %s51 = sphi 0, %s37
      %s59 = sphi 0, %s61
      %s62 = sphi 0, %s59
      %s63 = sphi 0, %s62
      %s79 = sphi 0, %s63
      %s87 = sphi 0, %s89
      %s90 = sphi 0, %s87
      %s91 = sphi 0, %s90
      %s107 = sphi 0, %s91
    $region4: #{tpu_custom_call.1} parent=1 // loop_header_branch
      %17 = sbr.rel (%p15) target = $region8
    $region5: #{tpu_custom_call.1} parent=1 // loop_body
      %s19 = ssub.s32 %s14, 1
      %s20 = ssub.s32 %s14, 2
      %s27 = sadd.s32 1, %s22
      %p28 = scmp.ge.s32.totalorder %s27, 1
      %s29 = scalar_select %p28, 0, %s27
      %s30 = sadd.s32 1, %s21
      %s31 = scalar_select %p28, %s30, %s21
      %p32 = scmp.ge.s32.totalorder %s31, 2
      %s33 = scalar_select %p32, 0, %s31
      %s35 = sadd.s32 %s34, 1
      %p38 = scmp.eq.s32.totalorder %s14, 1
      %p39 = scmp.ne.s32.totalorder %s34, %s36
      %p40 = scmp.eq.s32.totalorder %s14, 0
      %p41 = por %p39, %p40
      %p42 = scmp.ne.s32.totalorder %s34, %s36
      %p43 = scmp.eq.s32.totalorder %s19, 1
      %p44 = por %p42, %p43
      %p45 = scmp.ne.s32.totalorder %s36, %s37
      %p46 = scmp.eq.s32.totalorder %s19, 0
      %p47 = por %p45, %p46
      %p48 = scmp.ne.s32.totalorder %s36, %s37
      %p49 = scmp.eq.s32.totalorder %s20, 1
      %p50 = por %p48, %p49
      %p52 = scmp.ne.s32.totalorder %s37, %s51
      %p53 = scmp.eq.s32.totalorder %s20, 0
      %p54 = por %p52, %p53
      %s55 = ssub.s32 %s21, %s33
      %s56 = ssub.s32 %s22, %s29
      %s57 = sor.u32 %s55, %s56
      %p58 = scmp.eq.s32.totalorder %s57, 0
      %s60 = sadd.s32 %s59, 1
      %s61 = scalar_select %p58, %s59, %s60
      %p64 = pneg %p58
      %p65 = scmp.eq.s32.totalorder %s14, 1
      %p66 = por %p64, %p65
      %p67 = scmp.ne.s32.totalorder %s59, %s62
      %p68 = scmp.eq.s32.totalorder %s14, 0
      %p69 = por %p67, %p68
      %p70 = scmp.ne.s32.totalorder %s59, %s62
      %p71 = scmp.eq.s32.totalorder %s19, 1
      %p72 = por %p70, %p71
      %p73 = scmp.ne.s32.totalorder %s62, %s63
      %p74 = scmp.eq.s32.totalorder %s19, 0
      %p75 = por %p73, %p74
      %p76 = scmp.ne.s32.totalorder %s62, %s63
      %p77 = scmp.eq.s32.totalorder %s20, 1
      %p78 = por %p76, %p77
      %p80 = scmp.ne.s32.totalorder %s63, %s79
      %p81 = scmp.eq.s32.totalorder %s20, 0
      %p82 = por %p80, %p81
      %s83 = ssub.s32 %s21, %s33
      %s84 = ssub.s32 %s22, %s29
      %s85 = sor.u32 %s83, %s84
      %p86 = scmp.eq.s32.totalorder %s85, 0
      %s88 = sadd.s32 %s87, 1
      %s89 = scalar_select %p86, %s87, %s88
      %p92 = pneg %p86
      %p93 = scmp.eq.s32.totalorder %s14, 1
      %p94 = por %p92, %p93
      %p95 = scmp.ne.s32.totalorder %s87, %s90
      %p96 = scmp.eq.s32.totalorder %s14, 0
      %p97 = por %p95, %p96
      %p98 = scmp.ne.s32.totalorder %s87, %s90
      %p99 = scmp.eq.s32.totalorder %s19, 1
      %p100 = por %p98, %p99
      %p101 = scmp.ne.s32.totalorder %s90, %s91
      %p102 = scmp.eq.s32.totalorder %s19, 0
      %p103 = por %p101, %p102
      %p104 = scmp.ne.s32.totalorder %s90, %s91
      %p105 = scmp.eq.s32.totalorder %s20, 1
      %p106 = por %p104, %p105
      %p108 = scmp.ne.s32.totalorder %s91, %s107
      %p109 = scmp.eq.s32.totalorder %s20, 0
      %p110 = por %p108, %p109
      %p111 = scmp.le.s32.totalorder 1, %s14
      %p112 = scmp.lt.s32.totalorder %s14, 3
      %p113 = pnand %p111, %p112
      %p114 = pneg %p113
      // Predicated region
      $region9: #{tpu_custom_call.1} parent=5 // pred_check
        _
      $region10: #{tpu_custom_call.1} parent=5 // pred_check_branch
        %116 = sbr.rel (%p113) target = $region12
      $region11: #{tpu_custom_call.1} parent=5 // pred_region
        %s117 = ssub.s32 %s14, 1
        // Predicated region
        $region13: #{tpu_custom_call.1} parent=11 // pred_check
          %p118 = pneg %p47
        $region14: #{tpu_custom_call.1} parent=11 // pred_check_branch
          %120 = sbr.rel (%p118) target = $region16
        $region15: #{tpu_custom_call.1} parent=11 // pred_region
          _
        $region16: #{tpu_custom_call.1} parent=11 // pred_fallthru
          _
      $region12: #{tpu_custom_call.1} parent=5 // pred_fallthru
        _
      %p121 = scmp.lt.s32.totalorder %s14, 2
      // Predicated region
      $region17: #{tpu_custom_call.1} parent=5 // pred_check
        %p122 = pneg %p121
      $region18: #{tpu_custom_call.1} parent=5 // pred_check_branch
        %124 = sbr.rel (%p122) target = $region20
      $region19: #{tpu_custom_call.1} parent=5 // pred_region
        // Predicated region
        $region21: #{tpu_custom_call.1} parent=19 // pred_check
          %p125 = pneg %p69
        $region22: #{tpu_custom_call.1} parent=19 // pred_check_branch
          %127 = sbr.rel (%p125) target = $region24
        $region23: #{tpu_custom_call.1} parent=19 // pred_region
          %s128 = sand.u32 %s59, 1
          %s129 = scalar_lea.sflag [#allocation3], %s128
          %s130 = sand.u32 %s59, 1
          %s131 = smul.addr %s130, 4
          %s132 = scalar_lea.vmem [#allocation2], %s131
          %134 = vsyncadd %s129, 0
          %s135 = sadd.s32 %s22, %s21
          %s136 = smul.addr %s135, 4
          %s137 = scalar_lea.hbm %s1, %s136
          %s139 = sshll.u32 %s137, 4
          %s140 = int_to_ptr.hbm [resolvable:$true] %s139
          %s141 = sshll.u32 %s132, 4
          %s142 = int_to_ptr.vmem [resolvable:$true] %s141
          %144 = dma.hbm_to_vmem [thread:$0]  %s140, 64, %s142, %s129
        $region24: #{tpu_custom_call.1} parent=19 // pred_fallthru
          _
      $region20: #{tpu_custom_call.1} parent=5 // pred_fallthru
        _
      %p145 = scmp.le.s32.totalorder 1, %s14
      %p146 = scmp.lt.s32.totalorder %s14, 3
      %p147 = pnand %p145, %p146
      %p148 = pneg %p147
      // Predicated region
      $region25: #{tpu_custom_call.1} parent=5 // pred_check
        _
      $region26: #{tpu_custom_call.1} parent=5 // pred_check_branch
        %150 = sbr.rel (%p147) target = $region28
      $region27: #{tpu_custom_call.1} parent=5 // pred_region
        %s151 = ssub.s32 %s14, 1
        %s152 = sand.u32 %s62, 1
        %s153 = scalar_lea.sflag [#allocation3], %s152
        %s154 = sand.u32 %s62, 1
        %s155 = smul.addr %s154, 4
        %s156 = scalar_lea.vmem [#allocation2], %s155
        // Predicated region
        $region29: #{tpu_custom_call.1} parent=27 // pred_check
          %p157 = pneg %p75
        $region30: #{tpu_custom_call.1} parent=27 // pred_check_branch
          %159 = sbr.rel (%p157) target = $region32
        $region31: #{tpu_custom_call.1} parent=27 // pred_region
          %161 = dma.done %s153, 64
        $region32: #{tpu_custom_call.1} parent=27 // pred_fallthru
          _
        %p162 = pneg %p47
        %p163 = pneg %p44
        %s164 = sand.u32 %s62, 1
        %s165 = scalar_lea.sflag [#allocation3], %s164
        %s166 = sand.u32 %s62, 1
        %s167 = smul.addr %s166, 4
        %s168 = scalar_lea.vmem [#allocation2], %s167
        %p169 = pneg %p75
        %p170 = pneg %p72
        %p171 = pneg %p103
        %p172 = pneg %p100
        %s173 = sand.u32 %s90, 1
        %s174 = scalar_lea.sflag [#allocation4], %s173
        %s175 = sand.u32 %s90, 1
        %s176 = smul.addr %s175, 4
        %s177 = scalar_lea.vmem [#allocation5], %s176
        %v178 = vld [vmem:[%s0] sm:$0xf]
        %v179 = vld [vmem:[%s156] sm:$0xf]
        %181 = vset.pattern.permute.xlu0 0
        %182 = vperm.xlu0 %181, %v178
        %v183 = vpop.permute.xlu0 %182
        %v185 = vmul.f32 %v179, %v183
        %v186 = vand.u32 2147483647, %v185
        %vm187 = vcmp.le.f32.partialorder %v186, 0.7853982
        %vm188 = vcmp.lt.s32.totalorder %v185, 0
        %v189 = vand.u32 %v185, 2139095040
        %v190 = vshrl.u32 %v189, 23
        %v191 = vsub.s32 %v190, 127
        %v192 = vand.u32 2147483647, %v185
        %v193 = vand.u32 %v192, 8388607
        %v194 = vor.u32 %v193, 8388608
        %v195 = vsub.s32 0, %v194
        %v196 = vadd.s32 %v191, 1
        %vm197 = vcmp.gt.s32.totalorder %v196, 0
        %v198 = vsel %vm197, %v196, 0
        %v199 = vshrl.u32 %v198, 5
        %v200 = vand.u32 %v198, 31
        %v201 = vsub.s32 32, %v200
        %v202 = vshrl.u32 683565275, %v201
        %v203 = vshll.u32 683565275, %v200
        %v204 = vshrl.u32 2475754826, %v201
        %v205 = vor.u32 %v203, %v204
        %v206 = vshll.u32 2475754826, %v200
        %v207 = vshrl.u32 2131351028, %v201
        %v208 = vor.u32 %v206, %v207
        %v209 = vshll.u32 2131351028, %v200
        %v210 = vshrl.u32 2102212464, %v201
        %v211 = vor.u32 %v209, %v210
        %v212 = vshll.u32 2102212464, %v200
        %v213 = vshrl.u32 920167782, %v201
        %v214 = vor.u32 %v212, %v213
        %v215 = vshll.u32 920167782, %v200
        %v216 = vshrl.u32 1326507024, %v201
        %v217 = vor.u32 %v215, %v216
        %vm218 = vcmp.lt.s32.totalorder %v199, 1
        %vm219 = vcmp.lt.s32.totalorder %v199, 2
        %vm220 = vcmp.lt.s32.totalorder %v199, 3
        %vm221 = vcmp.lt.s32.totalorder %v199, 4
        %v222 = vsel %vm218, %v202, %v205
        %v223 = vsel %vm221, %v211, 2102212464
        %v224 = vsel %vm220, %v208, %v223
        %v225 = vsel %vm219, %v222, %v224
        %v226 = vsel %vm218, %v205, %v208
        %v227 = vsel %vm221, %v214, 920167782
        %v228 = vsel %vm220, %v211, %v227
        %v229 = vsel %vm219, %v226, %v228
        %v230 = vsel %vm218, %v208, %v211
        %v231 = vsel %vm221, %v217, 1326507024
        %v232 = vsel %vm220, %v214, %v231
        %v233 = vsel %vm219, %v230, %v232
        %v234 = vshll.u32 %v194, 8
        %v235 = vand.u32 %v234, 65535
        %v236 = vshrl.u32 %v234, 16
        %v237 = vand.u32 %v233, 65535
        %v238 = vshrl.u32 %v233, 16
        %v239 = vmul.u32 %v235, %v237
        %v240 = vmul.u32 %v235, %v238
        %v241 = vmul.u32 %v236, %v237
        %v242 = vmul.u32 %v236, %v238
        %v243 = vshll.u32 %v240, 16
        %v244 = vshrl.u32 %v240, 16
        %v245 = vshll.u32 %v241, 16
        %v246 = vshrl.u32 %v241, 16
        %vm247 = vc.u32 %v239, %v243
        %v248 = vsel %vm247, 1, 0
        %v249 = vadd.s32 %v239, %v243
        %v250 = vadd.s32 %v242, %v248
        %vm251 = vc.u32 %v249, %v245
        %v252 = vsel %vm251, 1, 0
        %v253 = vadd.s32 %v249, %v245
        %v254 = vadd.s32 %v250, %v252
        %v255 = vadd.s32 %v254, %v244
        %v256 = vadd.s32 %v255, %v246
        %v257 = vand.u32 %v234, 65535
        %v258 = vshrl.u32 %v234, 16
        %v259 = vand.u32 %v229, 65535
        %v260 = vshrl.u32 %v229, 16
        %v261 = vmul.u32 %v257, %v259
        %v262 = vmul.u32 %v257, %v260
        %v263 = vmul.u32 %v258, %v259
        %v264 = vmul.u32 %v258, %v260
        %v265 = vshll.u32 %v262, 16
        %v266 = vshrl.u32 %v262, 16
        %v267 = vshll.u32 %v263, 16
        %v268 = vshrl.u32 %v263, 16
        %vm269 = vc.u32 %v261, %v265
        %v270 = vsel %vm269, 1, 0
        %v271 = vadd.s32 %v261, %v265
        %v272 = vadd.s32 %v264, %v270
        %vm273 = vc.u32 %v271, %v267
        %v274 = vsel %vm273, 1, 0
        %v275 = vadd.s32 %v271, %v267
        %v276 = vadd.s32 %v272, %v274
        %v277 = vadd.s32 %v276, %v266
        %v278 = vadd.s32 %v277, %v268
        %v279 = vmul.u32 %v234, %v225
        %v280 = vadd.s32 %v256, %v275
        %vm281 = vc.u32 %v256, %v275
        %v282 = vadd.s32 %v278, 1
        %v283 = vsel %vm281, %v282, %v278
        %v284 = vadd.s32 %v279, %v283
        %v285 = vadd.s32 %v284, 536870912
        %v286 = vshrl.u32 %v285, 30
        %v287 = vshll.u32 %v286, 30
        %v288 = vsub.s32 %v284, %v287
        %vm289 = vcmp.lt.s32.totalorder %v288, 0
        %v290 = vsub.s32 0, %v288
        %v291 = vsel %vm289, %v290, %v288
        %v292 = vclz %v291
        %v293 = vsub.s32 %v292, 2
        %vm294 = vcmp.gt.s32.totalorder 0, %v293
        %v295 = vsel %vm294, 0, %v293
        %v296 = vsub.s32 32, %v295
        %v297 = vshll.u32 %v288, %v295
        %v298 = vshrl.u32 %v280, %v296
        %v299 = vor.u32 %v297, %v298
        %v300 = vsub.s32 4294967266, %v295
        %v301 = vadd.s32 %v300, 127
        %v302 = vshll.u32 %v301, 23
        %v303 = vor.u32 4788187, %v302
        %v304 = vand.u32 2147483647, %v303
        %v306 = vcvt.s32.f32 %v299
        %v307 = vmul.f32 %v306, %v304
        %v308 = vxor.u32 %v307, 2147483648
        %v309 = vsel %vm188, %v308, %v307
        %v310 = vsub.s32 4, %v286
        %v311 = vsel %vm188, %v310, %v286
        %v312 = vsel %vm187, %v185, %v309
        %v313 = vsel %vm187, 0, %v311
        %v314 = vmul.f32 %v312, %v312
        %v315 = vmul.f32 %v314, -0.001358992
        %v316 = vadd.f32 %v315, 0.041655596
        %v317 = vmul.f32 %v314, %v316
        %v318 = vadd.f32 %v317, -0.4999988
        %v319 = vmul.f32 %v314, %v318
        %v320 = vadd.f32 1.0, %v319
        %v321 = vmul.f32 %v312, %v312
        %v322 = vmul.f32 %v321, -0.00019511016
        %v323 = vadd.f32 %v322, 0.008332121
        %v324 = vmul.f32 %v321, %v323
        %v325 = vadd.f32 %v324, -0.16666654
        %v326 = vmul.f32 %v321, %v325
        %v327 = vadd.f32 %v326, 1.0
        %v328 = vmul.f32 %v327, %v312
        %vm329 = vweird.f32 %v185
        %v330 = vadd.s32 %v313, 3
        %v331 = vand.u32 %v330, 3
        %vm332 = vcmp.lt.s32.totalorder %v331, 2
        %vm333 = vcmp.eq.s32.totalorder %v331, 0
        %v334 = vxor.u32 %v328, 2147483648
        %v335 = vsel %vm333, %v320, %v334
        %vm336 = vcmp.eq.s32.totalorder %v331, 2
        %v337 = vxor.u32 %v320, 2147483648
        %v338 = vsel %vm336, %v337, %v328
        %v339 = vsel %vm332, %v335, %v338
        %v340 = vsel %vm329, nan, %v339
        %v341 = vmul.f32 %v340, %v340
        %342 = vset.pattern.permute.xlu0 1
        %343 = vperm.xlu0 %342, %v178
        %v344 = vpop.permute.xlu0 %343
        %v346 = vmul.f32 %v344, %v341
        %v347 = vadd.f32 %v179, %v346
        %vm348 = vcmask 125952
        %349 = vst.msk [vmem:[%s177] sm:$0xf] %vm348, %v347
        %s350 = sand.u32 %s90, 1
        %s351 = scalar_lea.sflag [#allocation4], %s350
        %s352 = sand.u32 %s90, 1
        %s353 = smul.addr %s352, 4
        %s354 = scalar_lea.vmem [#allocation5], %s353
        // Predicated region
        $region33: #{tpu_custom_call.1} parent=27 // pred_check
          %p355 = pneg %p100
        $region34: #{tpu_custom_call.1} parent=27 // pred_check_branch
          %357 = sbr.rel (%p355) target = $region36
        $region35: #{tpu_custom_call.1} parent=27 // pred_region
          %359 = vsyncadd %s351, 0
          %s360 = sadd.s32 %s24, %s23
          %s361 = smul.addr %s360, 4
          %s362 = scalar_lea.hbm %s2, %s361
          %s364 = sshll.u32 %s354, 4
          %s365 = int_to_ptr.vmem [resolvable:$true] %s364
          %s366 = sshll.u32 %s362, 4
          %s367 = int_to_ptr.hbm [resolvable:$true] %s366
          %369 = dma.vmem_to_hbm [thread:$0]  %s365, 64, %s367, %s351
        $region36: #{tpu_custom_call.1} parent=27 // pred_fallthru
          _
      $region28: #{tpu_custom_call.1} parent=5 // pred_fallthru
        _
      %p370 = scmp.le.s32.totalorder 2, %s14
      // Predicated region
      $region37: #{tpu_custom_call.1} parent=5 // pred_check
        %p371 = pneg %p370
      $region38: #{tpu_custom_call.1} parent=5 // pred_check_branch
        %373 = sbr.rel (%p371) target = $region40
      $region39: #{tpu_custom_call.1} parent=5 // pred_region
        %s374 = ssub.s32 %s14, 2
        // Predicated region
        $region41: #{tpu_custom_call.1} parent=39 // pred_check
          %p375 = pneg %p106
        $region42: #{tpu_custom_call.1} parent=39 // pred_check_branch
          %377 = sbr.rel (%p375) target = $region44
        $region43: #{tpu_custom_call.1} parent=39 // pred_region
          %s378 = sand.u32 %s91, 1
          %s379 = scalar_lea.sflag [#allocation4], %s378
          %s380 = sand.u32 %s91, 1
          %s381 = smul.addr %s380, 4
          %s382 = scalar_lea.vmem [#allocation5], %s381
          %384 = dma.done %s379, 64
        $region44: #{tpu_custom_call.1} parent=39 // pred_fallthru
          _
      $region40: #{tpu_custom_call.1} parent=5 // pred_fallthru
        _
    $region6: #{tpu_custom_call.1} parent=1 // loop_footer
      %s18 = sadd.s32 1, %s14
    $region7: #{tpu_custom_call.1} parent=1 // loop_footer_branch
      %13 = sbr.rel target = $region3
    $region8: #{tpu_custom_call.1} parent=1 // loop_exit
      _
    %385 = vsyncpa [#allocation3], 1
    %s386 = scalar_lea.sflag [#allocation3], 1
    %387 = vsyncpa %s386, 1
    %388 = vsyncpa [#allocation4], 1
    %s389 = scalar_lea.sflag [#allocation4], 1
    %390 = vsyncpa %s389, 1

</llo_original>
